<compile_context>
chip_gen: v6e
topology: v6e:2x2x1
jax: 0.10.0
libtpu: 0.0.40
codegen_flags: <defaults>
</compile_context>

<pallas_src>
import jax
import jax.numpy as jnp
from jax.experimental import pallas as pl
from jax.experimental.pallas import tpu as pltpu


def _make_ccs_kernel(n_true, tile_n, tiles_per_split, num_classes, eps=1e-12):
    """Build the CCS-loss kernel closure (all closure args are static Python values)."""

    def kernel(feat_ref, w_hbm_ref, label_ref, out_ref, w_vmem, acc_ref, dma_sem):
        i = pl.program_id(0)          # split index ("parallel"; maps to a TensorCore)
        j = pl.program_id(1)          # N-tile index within the split ("arbitrary")

        # Per-split init: pull the class weights into single-buffered VMEM (native dtype),
        # row-normalize them in place, and zero the scalar accumulator.
        @pl.when(j == 0)
        def _init():
            cp = pltpu.make_async_copy(w_hbm_ref, w_vmem, dma_sem)
            cp.start()
            cp.wait()
            w = w_vmem[...].astype(jnp.float32)                        # (C, D)
            wsq = jnp.sum(w * w, axis=1, keepdims=True)                # (C, 1)
            w_hat = w * jax.lax.rsqrt(jnp.maximum(wsq, jnp.float32(eps)))
            w_vmem[...] = w_hat.astype(w_vmem.dtype)
            acc_ref[...] = jnp.zeros_like(acc_ref)

        feat = feat_ref[...]                                           # (TN, D) native dtype
        labels = label_ref[...]                                        # (TN, 1) int32

        # Cosine numerators against every (unit-norm) class: feat @ w_hat^T on the MXU,
        # contraction over D, native-dtype operands, f32 accumulation.
        logits = jax.lax.dot_general(
            feat, w_vmem[...],
            dimension_numbers=(((1,), (1,)), ((), ())),
            preferred_element_type=jnp.float32)                        # (TN, C)

        # Select the label column per sample (one-hot mask + reduce over C).
        cls_ids = jax.lax.broadcasted_iota(jnp.int32, (tile_n, num_classes), 1)
        fw_dot = jnp.sum(jnp.where(cls_ids == labels, logits, 0.0),
                         axis=1, keepdims=True)                        # (TN, 1)

        # ||feature||^2 per row (VPU, f32); single rsqrt on the EUP.
        feat32 = feat.astype(jnp.float32)
        fea_sq = jnp.sum(feat32 * feat32, axis=1, keepdims=True)       # (TN, 1)
        cos = fw_dot * jax.lax.rsqrt(jnp.maximum(fea_sq, jnp.float32(eps)))

        # Mask rows beyond the true batch size (partial tail / clamped overhang tiles).
        tile_idx = i * tiles_per_split + j
        row = tile_idx * tile_n + jax.lax.broadcasted_iota(jnp.int32, (tile_n, 1), 0)
        partial = jnp.sum(jnp.where(row < n_true, cos, 0.0))
        acc_ref[...] = acc_ref[...] + partial

        # Last tile of this split: publish the per-split partial sum.
        @pl.when(j == pl.num_programs(1) - 1)
        def _finalize():
            out_ref[...] = acc_ref[...].reshape(1, 1, 1)

    return kernel


def _vmem_capacity_bytes():
    """Physical per-TensorCore VMEM (generation-aware), conservative fallback."""
    try:
        info = pltpu.get_tpu_info()
        cap = getattr(info, "vmem_capacity_bytes", None)
        if cap:
            return int(cap)
    except Exception:
        pass
    return 64 << 20       # v7x per-TC VMEM (smallest of the targets); v5e/v6e have 128 MiB


def _per_row_vmem_bytes(d, c, itemsize):
    """VMEM bytes consumed per tile row (streams + per-tile intermediates)."""
    per_row = 2 * d * itemsize        # feature stream (double-buffered)
    per_row += 2 * 128 * 4            # (tile_n, 1) int32 labels, lane-padded, double-buffered
    per_row += 2 * c * 4              # f32 logits tile + masked copy
    if itemsize < 4:
        per_row += d * 4              # transient f32 tile for ||f||^2 (bf16/fp8 inputs)
    return per_row


def _pick_tile_n(n, d, c, itemsize, budget_bytes):
    """Rows per tile: multiple of 8 (f32 sublane), streamed working set <= budget."""
    if n <= 8:
        return max(n, 1)
    tn = budget_bytes // _per_row_vmem_bytes(d, c, itemsize)
    tn = max(8, min(tn, 8192, (n // 8) * 8))
    return (tn // 8) * 8


def ccs_loss(feature, weight, label, *, _max_tile_rows=None):
    """feature: (N, D), weight: (C, D), label: (N,) int -> scalar f32 (= -mean cosine)."""
    n, d = feature.shape
    c, wd = weight.shape
    assert d == wd, f"feature dim {d} does not match with weight dim {wd}"
    assert n == label.shape[0]

    # Keep feature in its input dtype (no extra HBM pass); only align the small weight.
    if weight.dtype != feature.dtype:
        weight = weight.astype(feature.dtype)
    label2d = label.astype(jnp.int32).reshape(n, 1)

    itemsize = jnp.dtype(feature.dtype).itemsize
    phys_vmem = _vmem_capacity_bytes()
    fixed = c * d * itemsize + (1 << 20)              # resident weight scratch + slack
    budget = max(int(phys_vmem * 0.55) - fixed, 4 << 20)
    tile_n = _pick_tile_n(n, d, c, itemsize, budget)
    if _max_tile_rows is not None:                    # test hook: force multi-tile grids
        tile_n = max(1, min(tile_n, _max_tile_rows))
    n_tiles = pl.cdiv(n, tile_n)

    # 2-way split over a leading "parallel" axis: on v7x each TensorCore streams half of
    # the tiles into its own partial-sum slot; on 1-TC chips it just runs sequentially.
    n_split = 2 if n_tiles >= 2 else 1
    tiles_per_split = pl.cdiv(n_tiles, n_split)
    last_tile = n_tiles - 1

    def tile_map(i, j):
        # Clamp the overhang tile of an odd split (its rows are masked out in-kernel).
        return (jnp.minimum(i * tiles_per_split + j, last_tile), 0)

    # Explicit scoped-VMEM limit sized to the tiles (with headroom), generation-aware cap.
    need = tile_n * _per_row_vmem_bytes(d, c, itemsize) + fixed
    vmem_limit = int(min(max(need + need // 2 + (2 << 20), 16 << 20),
                         max(int(phys_vmem * 0.75), 32 << 20)))

    out = pl.pallas_call(
        _make_ccs_kernel(n, tile_n, tiles_per_split, c),
        out_shape=jax.ShapeDtypeStruct((n_split, 1, 1), jnp.float32),
        grid_spec=pltpu.PrefetchScalarGridSpec(
            num_scalar_prefetch=0,
            grid=(n_split, tiles_per_split),
            in_specs=[
                pl.BlockSpec((tile_n, d), tile_map),           # feature: streamed over N
                pl.BlockSpec(memory_space=pl.ANY),             # weight: raw HBM, manual DMA
                pl.BlockSpec((tile_n, 1), tile_map),           # labels: streamed over N
            ],
            out_specs=pl.BlockSpec((1, 1, 1), lambda i, j: (i, 0, 0)),
            scratch_shapes=[
                pltpu.VMEM((c, d), weight.dtype),              # single-buffered w_hat
                pltpu.VMEM((1, 1), jnp.float32),               # running cosine sum
                pltpu.SemaphoreType.DMA(()),                   # weight-copy semaphore
            ],
        ),
        compiler_params=pltpu.CompilerParams(
            dimension_semantics=("parallel", "arbitrary"),
            vmem_limit_bytes=vmem_limit,
        ),
    )(feature, weight, label2d)
    return -(jnp.sum(out) * jnp.float32(1.0 / n))


def _ccs_loss_ref(feature, weight, label):
    w_per_sample = weight[label]
    dot = jnp.sum(feature.astype(jnp.float32) * w_per_sample.astype(jnp.float32), axis=1)
    fea_norm = jnp.linalg.norm(feature.astype(jnp.float32), axis=1)
    w_norm = jnp.linalg.norm(w_per_sample.astype(jnp.float32), axis=1)
    return -jnp.mean(dot / (fea_norm * w_norm))


if __name__ == "__main__":
    k1, k2, k3, k4, k5, k6 = jax.random.split(jax.random.PRNGKey(0), 6)

    # Case 1: N deliberately NOT a multiple of the tile -> exercises the masked tail and
    # the 2-way split (one tile per split).
    N, D, C = 20, 128, 16
    feature = jax.random.normal(k1, (N, D), dtype=jnp.float32)
    weight = jax.random.normal(k2, (C, D), dtype=jnp.float32)
    label = jax.random.randint(k3, (N,), 0, C, dtype=jnp.int32)

    loss = ccs_loss(feature, weight, label)
    jax.block_until_ready(loss)
    ref = _ccs_loss_ref(feature, weight, label)
    assert jnp.allclose(loss, ref, atol=2e-5, rtol=1e-4), (loss, ref)

    # Case 2: force small tiles -> exercises multi-tile accumulation within a split and
    # the clamped overhang tile of an odd tile count (40 rows / 8-row tiles = 5 tiles).
    N2 = 40
    feature2 = jax.random.normal(k4, (N2, D), dtype=jnp.float32)
    weight2 = jax.random.normal(k5, (C, D), dtype=jnp.float32)
    label2 = jax.random.randint(k6, (N2,), 0, C, dtype=jnp.int32)

    loss2 = ccs_loss(feature2, weight2, label2, _max_tile_rows=8)
    jax.block_until_ready(loss2)
    ref2 = _ccs_loss_ref(feature2, weight2, label2)
    assert jnp.allclose(loss2, ref2, atol=2e-5, rtol=1e-4), (loss2, ref2)

    print("KERNEL_OK")
</pallas_src>

<mosaic_0001>
module attributes {stable_mosaic.version = 11 : i64} {
  func.func @kernel(%arg0: i32, %arg1: i32, %arg2: memref<16x128xf32, #tpu.memory_space<vmem>>, %arg3: memref<16x128xf32, #tpu.memory_space<any>>, %arg4: memref<16x1xi32, #tpu.memory_space<vmem>>, %arg5: memref<1x1x1xf32, #tpu.memory_space<vmem>>, %arg6: memref<16x128xf32, #tpu.memory_space<vmem>>, %arg7: memref<1x1xf32, #tpu.memory_space<vmem>>, %arg8: memref<!tpu.dma_semaphore, #tpu.memory_space<semaphore_mem>>) attributes {dimension_semantics = [#tpu.dimension_semantics<parallel>, #tpu.dimension_semantics<arbitrary>], iteration_bounds = array<i64: 2, 1>, scalar_prefetch = 0 : i64, scratch_operands = 3 : i64, tpu.core_type = #tpu.core_type<tc>, window_params = [{transform_indices = @transform_0, window_bounds = array<i64: 16, 128>}, {}, {transform_indices = @transform_2, window_bounds = array<i64: 16, 1>}, {transform_indices = @transform_3, window_bounds = array<i64: 1, 1, 1>}]} {
    %c0_i32 = arith.constant 0 : i32
    %0 = arith.cmpi eq, %arg1, %c0_i32 : i32
    %1 = arith.extui %0 : i1 to i32
    %c0_i32_0 = arith.constant 0 : i32
    %2 = arith.cmpi ne, %1, %c0_i32_0 : i32
    scf.if %2 {
      tpu.enqueue_dma source(%arg3 : memref<16x128xf32, #tpu.memory_space<any>>) target(%arg6 : memref<16x128xf32, #tpu.memory_space<vmem>>) target_semaphore(%arg8 : memref<!tpu.dma_semaphore, #tpu.memory_space<semaphore_mem>>)
      tpu.wait_dma2 semaphore(%arg8 : memref<!tpu.dma_semaphore, #tpu.memory_space<semaphore_mem>>) src(%arg3 : memref<16x128xf32, #tpu.memory_space<any>>) dst(%arg6 : memref<16x128xf32, #tpu.memory_space<vmem>>)
      %c0_18 = arith.constant 0 : index
      %c0_19 = arith.constant 0 : index
      %42 = vector.load %arg6[%c0_18, %c0_19] : memref<16x128xf32, #tpu.memory_space<vmem>>, vector<16x128xf32>
      %43 = arith.mulf %42, %42 : vector<16x128xf32>
      %cst_20 = arith.constant dense<0.000000e+00> : vector<16xf32>
      %44 = vector.multi_reduction <add>, %43, %cst_20 [1] : vector<16x128xf32> to vector<16xf32>
      %45 = vector.shape_cast %44 : vector<16xf32> to vector<16x1xf32>
      %cst_21 = arith.constant 9.99999996E-13 : f32
      %46 = vector.broadcast %cst_21 : f32 to vector<16x1xf32>
      %47 = arith.maximumf %45, %46 : vector<16x1xf32>
      %48 = math.rsqrt %47 : vector<16x1xf32>
      %49 = vector.broadcast %48 : vector<16x1xf32> to vector<16x128xf32>
      %50 = arith.mulf %42, %49 : vector<16x128xf32>
      %c0_22 = arith.constant 0 : index
      %c0_23 = arith.constant 0 : index
      %51 = vector.load %arg6[%c0_22, %c0_23] : memref<16x128xf32, #tpu.memory_space<vmem>>, vector<16x128xf32>
      tpu.vector_store %arg6[%c0_22, %c0_23], %50 {strides = array<i32>} : memref<16x128xf32, #tpu.memory_space<vmem>>, vector<16x128xf32>,
      %cst_24 = arith.constant 0.000000e+00 : f32
      %52 = vector.broadcast %cst_24 : f32 to vector<1x1xf32>
      %c0_25 = arith.constant 0 : index
      %c0_26 = arith.constant 0 : index
      %53 = vector.load %arg7[%c0_25, %c0_26] : memref<1x1xf32, #tpu.memory_space<vmem>>, vector<1x1xf32>
      tpu.vector_store %arg7[%c0_25, %c0_26], %52 {strides = array<i32>} : memref<1x1xf32, #tpu.memory_space<vmem>>, vector<1x1xf32>,
    } else {
    }
    %c0 = arith.constant 0 : index
    %c0_1 = arith.constant 0 : index
    %3 = vector.load %arg2[%c0, %c0_1] : memref<16x128xf32, #tpu.memory_space<vmem>>, vector<16x128xf32>
    %c0_2 = arith.constant 0 : index
    %c0_3 = arith.constant 0 : index
    %4 = vector.load %arg4[%c0_2, %c0_3] : memref<16x1xi32, #tpu.memory_space<vmem>>, vector<16x1xi32>
    %c0_4 = arith.constant 0 : index
    %c0_5 = arith.constant 0 : index
    %5 = vector.load %arg6[%c0_4, %c0_5] : memref<16x128xf32, #tpu.memory_space<vmem>>, vector<16x128xf32>
    %cst = arith.constant dense<0.000000e+00> : vector<16x16xf32>
    %6 = tpu.matmul %3, %5, %cst {dimension_numbers = #tpu.dot_dimension_numbers<[1], [1], [0], [0], [0, 0, 1, 0], [], []>} : vector<16x128xf32>, vector<16x128xf32>, vector<16x16xf32> -> vector<16x16xf32>
    %7 = tpu.iota {dimensions = array<i32: 1>} : vector<16x16xi32>
    %8 = vector.broadcast %4 : vector<16x1xi32> to vector<16x16xi32>
    %9 = arith.cmpi eq, %7, %8 : vector<16x16xi32>
    %cst_6 = arith.constant 0.000000e+00 : f32
    %10 = vector.broadcast %cst_6 : f32 to vector<16x16xf32>
    %11 = arith.select %9, %6, %10 : vector<16x16xi1>, vector<16x16xf32>
    %cst_7 = arith.constant dense<0.000000e+00> : vector<16xf32>
    %12 = vector.multi_reduction <add>, %11, %cst_7 [1] : vector<16x16xf32> to vector<16xf32>
    %13 = vector.shape_cast %12 : vector<16xf32> to vector<16x1xf32>
    %14 = arith.mulf %3, %3 : vector<16x128xf32>
    %cst_8 = arith.constant dense<0.000000e+00> : vector<16xf32>
    %15 = vector.multi_reduction <add>, %14, %cst_8 [1] : vector<16x128xf32> to vector<16xf32>
    %16 = vector.shape_cast %15 : vector<16xf32> to vector<16x1xf32>
    %cst_9 = arith.constant 9.99999996E-13 : f32
    %17 = vector.broadcast %cst_9 : f32 to vector<16x1xf32>
    %18 = arith.maximumf %16, %17 : vector<16x1xf32>
    %19 = math.rsqrt %18 : vector<16x1xf32>
    %20 = arith.mulf %13, %19 : vector<16x1xf32>
    %c1_i32 = arith.constant 1 : i32
    %21 = arith.muli %arg0, %c1_i32 : i32
    %22 = arith.addi %21, %arg1 : i32
    %c16_i32 = arith.constant 16 : i32
    %23 = arith.muli %22, %c16_i32 : i32
    %24 = tpu.iota {dimensions = array<i32: 0>} : vector<16x1xi32>
    %25 = vector.broadcast %23 : i32 to vector<16x1xi32>
    %26 = arith.addi %25, %24 : vector<16x1xi32>
    %c20_i32 = arith.constant 20 : i32
    %27 = vector.broadcast %c20_i32 : i32 to vector<16x1xi32>
    %28 = arith.cmpi slt, %26, %27 : vector<16x1xi32>
    %cst_10 = arith.constant 0.000000e+00 : f32
    %29 = vector.broadcast %cst_10 : f32 to vector<16x1xf32>
    %30 = arith.select %28, %20, %29 : vector<16x1xi1>, vector<16x1xf32>
    %31 = vector.shape_cast %30 : vector<16x1xf32> to vector<1x16x1xf32>
    %cst_11 = arith.constant dense<0.000000e+00> : vector<1xf32>
    %32 = vector.multi_reduction <add>, %31, %cst_11 [1, 2] : vector<1x16x1xf32> to vector<1xf32>
    %33 = vector.shape_cast %32 : vector<1xf32> to vector<1x1x1xf32>
    %34 = vector.extract %33[0, 0, 0] : f32 from vector<1x1x1xf32>
    %c0_12 = arith.constant 0 : index
    %c0_13 = arith.constant 0 : index
    %35 = vector.load %arg7[%c0_12, %c0_13] : memref<1x1xf32, #tpu.memory_space<vmem>>, vector<1x1xf32>
    %36 = vector.broadcast %34 : f32 to vector<1x1xf32>
    %37 = arith.addf %35, %36 : vector<1x1xf32>
    %c0_14 = arith.constant 0 : index
    %c0_15 = arith.constant 0 : index
    %38 = vector.load %arg7[%c0_14, %c0_15] : memref<1x1xf32, #tpu.memory_space<vmem>>, vector<1x1xf32>
    tpu.vector_store %arg7[%c0_14, %c0_15], %37 {strides = array<i32>} : memref<1x1xf32, #tpu.memory_space<vmem>>, vector<1x1xf32>,
    %c0_i32_16 = arith.constant 0 : i32
    %39 = arith.cmpi eq, %arg1, %c0_i32_16 : i32
    %40 = arith.extui %39 : i1 to i32
    %c0_i32_17 = arith.constant 0 : i32
    %41 = arith.cmpi ne, %40, %c0_i32_17 : i32
    scf.if %41 {
      %c0_18 = arith.constant 0 : index
      %c0_19 = arith.constant 0 : index
      %42 = vector.load %arg7[%c0_18, %c0_19] : memref<1x1xf32, #tpu.memory_space<vmem>>, vector<1x1xf32>
      %43 = vector.shape_cast %42 : vector<1x1xf32> to vector<1x1x1xf32>
      %c0_20 = arith.constant 0 : index
      %c0_21 = arith.constant 0 : index
      %c0_22 = arith.constant 0 : index
      %44 = vector.load %arg5[%c0_20, %c0_21, %c0_22] : memref<1x1x1xf32, #tpu.memory_space<vmem>>, vector<1x1x1xf32>
      tpu.vector_store %arg5[%c0_20, %c0_21, %c0_22], %43 {strides = array<i32>} : memref<1x1x1xf32, #tpu.memory_space<vmem>>, vector<1x1x1xf32>,
    } else {
    }
    return
  }
  func.func @transform_0(%arg0: i32, %arg1: i32) -> (i32, i32) {
    %c1_i32 = arith.constant 1 : i32
    %0 = arith.muli %arg0, %c1_i32 : i32
    %1 = arith.addi %0, %arg1 : i32
    %c1_i32_0 = arith.constant 1 : i32
    %2 = arith.minsi %1, %c1_i32_0 : i32
    %c0_i32 = arith.constant 0 : i32
    %c0_i32_1 = arith.constant 0 : i32
    return %2, %c0_i32 : i32, i32
  }
  func.func @transform_2(%arg0: i32, %arg1: i32) -> (i32, i32) {
    %c1_i32 = arith.constant 1 : i32
    %0 = arith.muli %arg0, %c1_i32 : i32
    %1 = arith.addi %0, %arg1 : i32
    %c1_i32_0 = arith.constant 1 : i32
    %2 = arith.minsi %1, %c1_i32_0 : i32
    %c0_i32 = arith.constant 0 : i32
    %c0_i32_1 = arith.constant 0 : i32
    return %2, %c0_i32 : i32, i32
  }
  func.func @transform_3(%arg0: i32, %arg1: i32) -> (i32, i32, i32) {
    %c0_i32 = arith.constant 0 : i32
    %c0_i32_0 = arith.constant 0 : i32
    %c0_i32_1 = arith.constant 0 : i32
    return %arg0, %c0_i32, %c0_i32_0 : i32, i32, i32
  }
}

</mosaic_0001>

<llo_original>
// kernel: tpu_custom_call.1
$region0: #{tpu_custom_call.1}
  #allocation0 [shape = 'u32[]', space=smem, size = 0x4, offset = 0x4, fixed_abs, tag = 'smem constant byte address 0x4 - core index']
  #allocation1 [shape = 'u32[144,128]{1,0:T(1,128)}', space=vmem, size = 0x12000, scoped, tag = 'internal scratch']
  #allocation2 [shape = 'f32[16,128]{1,0:T(8,128)}', space=vmem, size = 0x2000, scoped, tag = 'scratch operand']
  #allocation3 [shape = 'f32[1,1]{1,0:T(1,128)}', space=vmem, size = 0x200, scoped, tag = 'scratch operand']
  #allocation4 [shape = 's32[1]{0}', space=sflag, size = 0x4, scoped, tag = 'scratch operand']
  #allocation5 [shape = 's32[]', space=sflag, size = 0x4, offset = 0, fixed_abs, tag = 'sflag constant byte address 0x0 - dummy sync flag']
  #allocation6 [shape = 's32[]', space=sflag, size = 0x4, offset = 0, fixed_abs, tag = 'sflag constant byte address 0x0 - dummy sync flag']
  #allocation7 [shape = 'u32[]', space=smem, size = 0x4, offset = 0x44, fixed_abs, tag = 'smem constant byte address 0x44 - assertion arg 0']
  #allocation8 [shape = 'u32[]', space=smem, size = 0x4, offset = 0x48, fixed_abs, tag = 'smem constant byte address 0x48 - assertion arg 1']
  %s0 = inlined_call_operand.vmem [shape: f32[20,128], index: 0, kind: input, shape index: {}]
  %s1 = inlined_call_operand.hbm [shape: f32[16,128], index: 1, kind: input, shape index: {}]
  %s2 = inlined_call_operand.vmem [shape: s32[20,1], index: 2, kind: input, shape index: {}]
  %s3 = inlined_call_operand.vmem [shape: f32[2,1,1], index: 3, kind: output, shape index: {}]
  %s4 = sld [smem:[#allocation0]]
  $region53: #{tpu_custom_call.1} parent=0
    _
  %s6 = ssub.s32 1, %s4
  %s7 = scalar_select 0, %s6, %s4
  loop: start=0, step=1, limit=4
  $region2: #{tpu_custom_call.1} parent=0 // loop_pre_header
    _
  $region3: #{tpu_custom_call.1} parent=0 // loop_header
    %s9 = sphi 0, %s13
    %p10 = scmp.ge.s32.totalorder %s9, 4
    %s16 = sphi 0, %s28
    %s17 = sphi 0, %s24
    %s18 = sphi 0, %s16
    %s19 = sphi 0, %s17
    %s20 = sphi 0, %s18
    %s21 = sphi 0, %s19
    %s37 = sphi 0, %s39
    %s40 = sphi 0, %s37
    %s41 = sphi 0, %s40
    %s57 = sphi 0, %s41
    %s69 = sphi 0, %s71
    %s72 = sphi 0, %s69
    %s73 = sphi 0, %s72
    %s89 = sphi 0, %s73
    %s95 = sphi 0, %s97
    %s98 = sphi 0, %s95
    %s99 = sphi 0, %s98
    %s115 = sphi 0, %s99
  $region4: #{tpu_custom_call.1} parent=0 // loop_header_branch
    %12 = sbr.rel (%p10) target = $region8
  $region5: #{tpu_custom_call.1} parent=0 // loop_body
    %s14 = ssub.s32 %s9, 1
    %s15 = ssub.s32 %s9, 2
    %s22 = sadd.s32 1, %s17
    %p23 = scmp.ge.s32.totalorder %s22, 1
    %s24 = scalar_select %p23, 0, %s22
    %s25 = sadd.s32 1, %s16
    %s26 = scalar_select %p23, %s25, %s16
    %p27 = scmp.ge.s32.totalorder %s26, 2
    %s28 = scalar_select %p27, 0, %s26
    %s29 = sadd.s32 %s16, %s17
    %p30 = scmp.lt.s32.totalorder %s29, 1
    %s31 = scalar_select %p30, %s29, 1
    %s32 = sadd.s32 %s28, %s24
    %p33 = scmp.lt.s32.totalorder %s32, 1
    %s34 = scalar_select %p33, %s32, 1
    %s35 = ssub.s32 %s31, %s34
    %p36 = scmp.eq.s32.totalorder %s35, 0
    %s38 = sadd.s32 %s37, 1
    %s39 = scalar_select %p36, %s37, %s38
    %p42 = pneg %p36
    %p43 = scmp.eq.s32.totalorder %s9, 1
    %p44 = por %p42, %p43
    %p45 = scmp.ne.s32.totalorder %s37, %s40
    %p46 = scmp.eq.s32.totalorder %s9, 0
    %p47 = por %p45, %p46
    %p48 = scmp.ne.s32.totalorder %s37, %s40
    %p49 = scmp.eq.s32.totalorder %s14, 1
    %p50 = por %p48, %p49
    %p51 = scmp.ne.s32.totalorder %s40, %s41
    %p52 = scmp.eq.s32.totalorder %s14, 0
    %p53 = por %p51, %p52
    %p54 = scmp.ne.s32.totalorder %s40, %s41
    %p55 = scmp.eq.s32.totalorder %s15, 1
    %p56 = por %p54, %p55
    %p58 = scmp.ne.s32.totalorder %s41, %s57
    %p59 = scmp.eq.s32.totalorder %s15, 0
    %p60 = por %p58, %p59
    %s61 = sadd.s32 %s16, %s17
    %p62 = scmp.lt.s32.totalorder %s61, 1
    %s63 = scalar_select %p62, %s61, 1
    %s64 = sadd.s32 %s28, %s24
    %p65 = scmp.lt.s32.totalorder %s64, 1
    %s66 = scalar_select %p65, %s64, 1
    %s67 = ssub.s32 %s63, %s66
    %p68 = scmp.eq.s32.totalorder %s67, 0
    %s70 = sadd.s32 %s69, 1
    %s71 = scalar_select %p68, %s69, %s70
    %p74 = pneg %p68
    %p75 = scmp.eq.s32.totalorder %s9, 1
    %p76 = por %p74, %p75
    %p77 = scmp.ne.s32.totalorder %s69, %s72
    %p78 = scmp.eq.s32.totalorder %s9, 0
    %p79 = por %p77, %p78
    %p80 = scmp.ne.s32.totalorder %s69, %s72
    %p81 = scmp.eq.s32.totalorder %s14, 1
    %p82 = por %p80, %p81
    %p83 = scmp.ne.s32.totalorder %s72, %s73
    %p84 = scmp.eq.s32.totalorder %s14, 0
    %p85 = por %p83, %p84
    %p86 = scmp.ne.s32.totalorder %s72, %s73
    %p87 = scmp.eq.s32.totalorder %s15, 1
    %p88 = por %p86, %p87
    %p90 = scmp.ne.s32.totalorder %s73, %s89
    %p91 = scmp.eq.s32.totalorder %s15, 0
    %p92 = por %p90, %p91
    %s93 = ssub.s32 %s16, %s28
    %p94 = scmp.eq.s32.totalorder %s93, 0
    %s96 = sadd.s32 %s95, 1
    %s97 = scalar_select %p94, %s95, %s96
    %p100 = pneg %p94
    %p101 = scmp.eq.s32.totalorder %s9, 1
    %p102 = por %p100, %p101
    %p103 = scmp.ne.s32.totalorder %s95, %s98
    %p104 = scmp.eq.s32.totalorder %s9, 0
    %p105 = por %p103, %p104
    %p106 = scmp.ne.s32.totalorder %s95, %s98
    %p107 = scmp.eq.s32.totalorder %s14, 1
    %p108 = por %p106, %p107
    %p109 = scmp.ne.s32.totalorder %s98, %s99
    %p110 = scmp.eq.s32.totalorder %s14, 0
    %p111 = por %p109, %p110
    %p112 = scmp.ne.s32.totalorder %s98, %s99
    %p113 = scmp.eq.s32.totalorder %s15, 1
    %p114 = por %p112, %p113
    %p116 = scmp.ne.s32.totalorder %s99, %s115
    %p117 = scmp.eq.s32.totalorder %s15, 0
    %p118 = por %p116, %p117
    %p119 = scmp.le.s32.totalorder 1, %s9
    %p120 = scmp.lt.s32.totalorder %s9, 3
    %p121 = pnand %p119, %p120
    %p122 = pneg %p121
    // Predicated region
    $region9: #{tpu_custom_call.1} parent=5 // pred_check
      _
    $region10: #{tpu_custom_call.1} parent=5 // pred_check_branch
      %124 = sbr.rel (%p121) target = $region12
    $region11: #{tpu_custom_call.1} parent=5 // pred_region
      %s125 = ssub.s32 %s9, 1
    $region12: #{tpu_custom_call.1} parent=5 // pred_fallthru
      _
    %p126 = scmp.lt.s32.totalorder %s9, 2
    // Predicated region
    $region13: #{tpu_custom_call.1} parent=5 // pred_check
      %p127 = pneg %p126
    $region14: #{tpu_custom_call.1} parent=5 // pred_check_branch
      %129 = sbr.rel (%p127) target = $region16
    $region15: #{tpu_custom_call.1} parent=5 // pred_region
      // Predicated region
      $region17: #{tpu_custom_call.1} parent=15 // pred_check
        %p130 = pneg %p47
      $region18: #{tpu_custom_call.1} parent=15 // pred_check_branch
        %132 = sbr.rel (%p130) target = $region20
      $region19: #{tpu_custom_call.1} parent=15 // pred_region
        %s133 = sadd.s32 %s16, %s17
        %p134 = scmp.lt.s32.totalorder %s133, 1
        %s135 = scalar_select %p134, %s133, 1
        %s136 = smul.u32 2, %s135
        %s137 = ssub.s32 3, %s136
        %p138 = scmp.lt.s32.totalorder %s137, 2
        %s139 = scalar_select %p138, %s137, 2
        %s140 = smul.u32 128, %s139
        %p141 = scmp.lt.s32.totalorder %s136, 2
        %s142 = scalar_select %p141, %s136, 2
        %s143 = smul.addr %s142, 8
        %s144 = scalar_lea.vmem %s0, %s143
        %s145 = sadd.s32 %s16, %s17
        %p146 = scmp.lt.s32.totalorder %s145, 1
        %s147 = scalar_select %p146, %s145, 1
        %s148 = smul.u32 2, %s147
        %s149 = ssub.s32 3, %s148
        %p150 = scmp.lt.s32.totalorder %s149, 2
        %s151 = scalar_select %p150, %s149, 2
        %s152 = smul.u32 128, %s151
      $region20: #{tpu_custom_call.1} parent=15 // pred_fallthru
        _
      // Predicated region
      $region21: #{tpu_custom_call.1} parent=15 // pred_check
        %p153 = pneg %p79
      $region22: #{tpu_custom_call.1} parent=15 // pred_check_branch
        %155 = sbr.rel (%p153) target = $region24
      $region23: #{tpu_custom_call.1} parent=15 // pred_region
        %s156 = sadd.s32 %s16, %s17
        %p157 = scmp.lt.s32.totalorder %s156, 1
        %s158 = scalar_select %p157, %s156, 1
        %s159 = smul.u32 2, %s158
        %s160 = ssub.s32 3, %s159
        %p161 = scmp.lt.s32.totalorder %s160, 2
        %s162 = scalar_select %p161, %s160, 2
        %s163 = smul.u32 128, %s162
        %p164 = scmp.lt.s32.totalorder %s159, 2
        %s165 = scalar_select %p164, %s159, 2
        %s166 = smul.addr %s165, 8
        %s167 = scalar_lea.vmem %s2, %s166
        %s168 = sadd.s32 %s16, %s17
        %p169 = scmp.lt.s32.totalorder %s168, 1
        %s170 = scalar_select %p169, %s168, 1
        %s171 = smul.u32 2, %s170
        %s172 = ssub.s32 3, %s171
        %p173 = scmp.lt.s32.totalorder %s172, 2
        %s174 = scalar_select %p173, %s172, 2
        %s175 = smul.u32 128, %s174
      $region24: #{tpu_custom_call.1} parent=15 // pred_fallthru
        _
    $region16: #{tpu_custom_call.1} parent=5 // pred_fallthru
      _
    %p176 = scmp.le.s32.totalorder 1, %s9
    %p177 = scmp.lt.s32.totalorder %s9, 3
    %p178 = pnand %p176, %p177
    %p179 = pneg %p178
    // Predicated region
    $region25: #{tpu_custom_call.1} parent=5 // pred_check
      _
    $region26: #{tpu_custom_call.1} parent=5 // pred_check_branch
      %181 = sbr.rel (%p178) target = $region28
    $region27: #{tpu_custom_call.1} parent=5 // pred_region
      %s182 = ssub.s32 %s9, 1
      %s183 = sadd.s32 %s18, %s19
      %p184 = scmp.lt.s32.totalorder %s183, 1
      %s185 = scalar_select %p184, %s183, 1
      %s186 = smul.u32 2, %s185
      %s187 = ssub.s32 3, %s186
      %p188 = scmp.lt.s32.totalorder %s187, 2
      %s189 = scalar_select %p188, %s187, 2
      %s190 = smul.u32 128, %s189
      %p191 = scmp.lt.s32.totalorder %s186, 2
      %s192 = scalar_select %p191, %s186, 2
      %s193 = smul.addr %s192, 8
      %s194 = scalar_lea.vmem %s0, %s193
      %p195 = pneg %p53
      %p196 = pneg %p50
      %s197 = sadd.s32 %s18, %s19
      %p198 = scmp.lt.s32.totalorder %s197, 1
      %s199 = scalar_select %p198, %s197, 1
      %s200 = smul.u32 2, %s199
      %s201 = ssub.s32 3, %s200
      %p202 = scmp.lt.s32.totalorder %s201, 2
      %s203 = scalar_select %p202, %s201, 2
      %s204 = smul.u32 128, %s203
      %p205 = scmp.lt.s32.totalorder %s200, 2
      %s206 = scalar_select %p205, %s200, 2
      %s207 = smul.addr %s206, 8
      %s208 = scalar_lea.vmem %s2, %s207
      %p209 = pneg %p85
      %p210 = pneg %p82
      %p211 = pneg %p111
      %p212 = pneg %p108
      %p213 = scmp.lt.s32.totalorder %s18, 1
      %s214 = scalar_select %p213, %s18, 1
      %s215 = scalar_lea.vmem %s3, %s214
      %s216 = sadd.s32 %s18, %s19
      %p217 = scmp.lt.s32.totalorder %s216, 1
      %s218 = scalar_select %p217, %s216, 1
      %s219 = smul.u32 2, %s218
      %s220 = ssub.s32 3, %s219
      %p221 = scmp.lt.s32.totalorder %s220, 2
      %s222 = scalar_select %p221, %s220, 2
      %s223 = smul.u32 128, %s222
      %p224 = scmp.lt.s32.totalorder %s219, 2
      %s225 = scalar_select %p224, %s219, 2
      %s226 = smul.addr %s225, 8
      %s227 = scalar_lea.vmem %s0, %s226
      %s228 = sadd.s32 %s18, %s19
      %p229 = scmp.lt.s32.totalorder %s228, 1
      %s230 = scalar_select %p229, %s228, 1
      %s231 = smul.u32 2, %s230
      %s232 = ssub.s32 3, %s231
      %p233 = scmp.lt.s32.totalorder %s232, 2
      %s234 = scalar_select %p233, %s232, 2
      %s235 = smul.u32 128, %s234
      %s236 = sadd.s32 %s18, %s19
      %p237 = scmp.lt.s32.totalorder %s236, 1
      %s238 = scalar_select %p237, %s236, 1
      %s239 = smul.u32 2, %s238
      %s240 = ssub.s32 3, %s239
      %p241 = scmp.lt.s32.totalorder %s240, 2
      %s242 = scalar_select %p241, %s240, 2
      %s243 = smul.u32 128, %s242
      %p244 = scmp.lt.s32.totalorder %s239, 2
      %s245 = scalar_select %p244, %s239, 2
      %s246 = smul.addr %s245, 8
      %s247 = scalar_lea.vmem %s2, %s246
      %s248 = sadd.s32 %s18, %s19
      %p249 = scmp.lt.s32.totalorder %s248, 1
      %s250 = scalar_select %p249, %s248, 1
      %s251 = smul.u32 2, %s250
      %s252 = ssub.s32 3, %s251
      %p253 = scmp.lt.s32.totalorder %s252, 2
      %s254 = scalar_select %p253, %s252, 2
      %s255 = smul.u32 128, %s254
      %p256 = scmp.lt.s32.totalorder %s18, 1
      %s257 = scalar_select %p256, %s18, 1
      %s258 = scalar_lea.vmem %s3, %s257
      %p259 = scmp.eq.s32.totalorder %s19, 0
      // Predicated region
      $region29: #{tpu_custom_call.1} parent=27 // pred_check
        %p260 = pneg %p259
      $region30: #{tpu_custom_call.1} parent=27 // pred_check_branch
        %262 = sbr.rel (%p260) target = $region32
      $region31: #{tpu_custom_call.1} parent=27 // pred_region
        // Predicated region
        $region33: #{tpu_custom_call.1} parent=31 // pred_check
          _
        $region34: #{tpu_custom_call.1} parent=31 // pred_check_branch
          %264 = sbr.rel target = $region36
        $region35: #{tpu_custom_call.1} parent=31 // pred_region
          %265 = sst [smem:[#allocation7]] [#allocation6]
          %266 = sst [smem:[#allocation8]] [#allocation5]
        $region36: #{tpu_custom_call.1} parent=31 // pred_fallthru
          _
        %268 = shalt.err (0)
        %s270 = sshll.u32 [#allocation2], 4
        %s271 = int_to_ptr.vmem [resolvable:$true] %s270
        %273 = dma.hbm_to_vmem [thread:$0]  %s1, 256, %s271, [#allocation4]
        %s274 = smul.u32 16, 1
        %s275 = sshll.u32 %s274, 4
        %276 = dma.done [#allocation4], %s275
        %v277 = vld [vmem:[#allocation2] sm:$0xff]
        %v278 = vld [vmem:[#allocation2 + $0x8] sm:$0xff]
        %v279 = vmul.f32 %v277, %v277
        %v280 = vmul.f32 %v278, %v278
        %281 = vadd.xlane.f32.xlu0 %v279
        %v282 = vpop.xlane.xlu0 %281
        %283 = vadd.xlane.f32.xlu0 %v280
        %v284 = vpop.xlane.xlu0 %283
        %v285 = vmax.f32 %v282, 1e-12
        %v286 = vmax.f32 %v284, 1e-12
        %v287 = vrsqrt.pop %v285
        %v288 = vrsqrt.pop %v286
        %v289 = vmul.f32 %v277, %v287
        %v290 = vmul.f32 %v278, %v288
        %291 = vst [vmem:[#allocation2] sm:$0xff] %v289
        %292 = vst [vmem:[#allocation2 + $0x8] sm:$0xff] %v290
        %vm293 = vcmask 0
        %294 = vst.msk [vmem:[#allocation3] sm:$0x1] %vm293, 0.0
      $region32: #{tpu_custom_call.1} parent=27 // pred_fallthru
        _
      %v295 = vld [vmem:[%s227] sm:$0xff]
      %v296 = vld [vmem:[%s227 + $0x8] sm:$0xff]
      %v297 = vld [vmem:[%s247] sm:$0xff]
      %v298 = vld [vmem:[%s247 + $0x8] sm:$0xff]
      %v299 = vld [vmem:[#allocation2] sm:$0xff]
      %v300 = vld [vmem:[#allocation2 + $0x8] sm:$0xff]
      %301 = vmatprep.subr.mxu0 0.0
      %302 = vmatpush1.xpose.msra.mxu0 0.0
      %303 = vmatprep.subr.mxu0 0.0
      %304 = vmatpush1.xpose.msra.mxu0 0.0
      %305 = vmatprep.subr.mxu0 0.0
      %306 = vmatpush1.xpose.msra.mxu0 0.0
      %307 = vmatprep.subr.mxu0 0.0
      %308 = vmatpush1.xpose.msra.mxu0 0.0
      %309 = vmatprep.subr.mxu0 0.0
      %310 = vmatpush1.xpose.msra.mxu0 0.0
      %311 = vmatprep.subr.mxu0 0.0
      %312 = vmatpush1.xpose.msra.mxu0 0.0
      %313 = vmatprep.subr.mxu0 0.0
      %314 = vmatpush1.xpose.msra.mxu0 0.0
      %315 = vmatprep.subr.mxu0 0.0
      %316 = vmatpush1.xpose.msra.mxu0 0.0
      %317 = vmatprep.subr.mxu0 0.0
      %318 = vmatpush1.xpose.msra.mxu0 0.0
      %319 = vmatprep.subr.mxu0 0.0
      %320 = vmatpush1.xpose.msra.mxu0 0.0
      %321 = vmatprep.subr.mxu0 0.0
      %322 = vmatpush1.xpose.msra.mxu0 0.0
      %323 = vmatprep.subr.mxu0 0.0
      %324 = vmatpush1.xpose.msra.mxu0 0.0
      %325 = vmatprep.subr.mxu0 0.0
      %326 = vmatpush1.xpose.msra.mxu0 0.0
      %327 = vmatprep.subr.mxu0 0.0
      %328 = vmatpush1.xpose.msra.mxu0 0.0
      %329 = vmatprep.subr.mxu0 0.0
      %330 = vmatpush1.xpose.msra.mxu0 %v300
      %331 = vmatprep.subr.mxu0 0.0
      %332 = vmatpush1.xpose.msra.mxu0 %v299
      %333 = vmatprep.subr.mxu0 0.0
      %334 = vmatpush2.xpose.msra.mxu0 0.0
      %335 = vmatprep.subr.mxu0 0.0
      %336 = vmatpush2.xpose.msra.mxu0 0.0
      %337 = vmatprep.subr.mxu0 0.0
      %338 = vmatpush2.xpose.msra.mxu0 0.0
      %339 = vmatprep.subr.mxu0 0.0
      %340 = vmatpush2.xpose.msra.mxu0 0.0
      %341 = vmatprep.subr.mxu0 0.0
      %342 = vmatpush2.xpose.msra.mxu0 0.0
      %343 = vmatprep.subr.mxu0 0.0
      %344 = vmatpush2.xpose.msra.mxu0 0.0
      %345 = vmatprep.subr.mxu0 0.0
      %346 = vmatpush2.xpose.msra.mxu0 0.0
      %347 = vmatprep.subr.mxu0 0.0
      %348 = vmatpush2.xpose.msra.mxu0 0.0
      %349 = vmatprep.subr.mxu0 0.0
      %350 = vmatpush2.xpose.msra.mxu0 0.0
      %351 = vmatprep.subr.mxu0 0.0
      %352 = vmatpush2.xpose.msra.mxu0 0.0
      %353 = vmatprep.subr.mxu0 0.0
      %354 = vmatpush2.xpose.msra.mxu0 0.0
      %355 = vmatprep.subr.mxu0 0.0
      %356 = vmatpush2.xpose.msra.mxu0 0.0
      %357 = vmatprep.subr.mxu0 0.0
      %358 = vmatpush2.xpose.msra.mxu0 0.0
      %359 = vmatprep.subr.mxu0 0.0
      %360 = vmatpush2.xpose.msra.mxu0 0.0
      %361 = vmatprep.subr.mxu0 0.0
      %362 = vmatpush2.xpose.msra.mxu0 0.0
      %363 = vmatprep.subr.mxu0 0.0
      %364 = vmatpush2.xpose.msra.mxu0 0.0
      %365 = vmatprep.mubr.f32.mxu0 0.0
      %366 = vmatmul.mubr.f32.gmra.mxu0 %v295
      %v367 = vpop.f32.mrf.mxu0
      %v368 = vadd.f32 0.0, %v367
      %v369 = vpop.f32.mrf.mxu0
      %370 = vmatprep.mubr.f32.mxu0 0.0
      %371 = vmatmul.mubr.f32.gmra.mxu0 %v296
      %v372 = vpop.f32.mrf.mxu0
      %v373 = vadd.f32 0.0, %v372
      %v374 = vpop.f32.mrf.mxu0
      %375 = vdwg.mxu0
      %v376 = vlaneseq
      %v377 = vand.u32 %v376, 127
      %378 = vset.pattern.permute.xlu0 0
      %379 = vperm.xlu0 %378, %v297
      %v380 = vpop.permute.xlu0 %379
      %381 = vset.pattern.permute.xlu0 0
      %382 = vperm.xlu0 %381, %v298
      %v383 = vpop.permute.xlu0 %382
      %vm384 = vcmp.eq.s32.totalorder %v377, %v380
      %vm385 = vcmp.eq.s32.totalorder %v377, %v383
      %v386 = vsel %vm384, %v368, 0.0
      %v387 = vsel %vm385, %v373, 0.0
      %vm388 = vcmask 130048
      %v389 = vsel %vm388, %v386, 0.0
      %390 = vadd.xlane.f32.xlu0 %v389
      %v391 = vpop.xlane.xlu0 %390
      %v392 = vsel %vm388, %v387, 0.0
      %393 = vadd.xlane.f32.xlu0 %v392
      %v394 = vpop.xlane.xlu0 %393
      %v395 = vmul.f32 %v295, %v295
      %v396 = vmul.f32 %v296, %v296
      %397 = vadd.xlane.f32.xlu0 %v395
      %v398 = vpop.xlane.xlu0 %397
      %399 = vadd.xlane.f32.xlu0 %v396
      %v400 = vpop.xlane.xlu0 %399
      %v401 = vmax.f32 %v398, 1e-12
      %v402 = vmax.f32 %v400, 1e-12
      %v403 = vrsqrt.pop %v401
      %v404 = vrsqrt.pop %v402
      %v405 = vmul.f32 %v391, %v403
      %v406 = vmul.f32 %v394, %v404
      %s407 = sadd.s32 %s18, %s19
      %s408 = smul.u32 %s407, 16
      %v409 = vlaneseq
      %v410 = vshrl.u32 %v409, 7
      %v411 = vadd.s32 %v410, 8
      %v412 = vstv %s408
      %v413 = vadd.s32 %v412, %v410
      %v414 = vadd.s32 %v412, %v411
      %vm415 = vcmp.lt.s32.totalorder %v413, 20
      %vm416 = vcmp.lt.s32.totalorder %v414, 20
      %v417 = vsel %vm415, %v405, 0.0
      %v418 = vsel %vm416, %v406, 0.0
      %vm419 = vcmask 7168
      %v420 = vsel %vm419, %v417, 0.0
      %v421 = vsel %vm419, %v418, 0.0
      %v422 = vadd.f32 %v420, %v421
      %423 = vadd.xlane.f32.xlu0 %v422
      %v424 = vpop.xlane.xlu0 %423
      %v425 = vrot.slane %v424, 4
      %v426 = vadd.f32 %v424, %v425
      %v427 = vrot.slane %v426, 2
      %v428 = vadd.f32 %v426, %v427
      %v429 = vrot.slane %v428, 1
      %v430 = vadd.f32 %v428, %v429
      %s431 = vtos %v430
      %v432 = vld [vmem:[#allocation3] sm:$0x1]
      %v433 = vstv %s431
      %v434 = vadd.f32 %v432, %v433
      %vm435 = vcmask 0
      %436 = vst.msk [vmem:[#allocation3] sm:$0x1] %vm435, %v434
      // Predicated region
      $region37: #{tpu_custom_call.1} parent=27 // pred_check
        %p437 = pneg %p259
      $region38: #{tpu_custom_call.1} parent=27 // pred_check_branch
        %439 = sbr.rel (%p437) target = $region40
      $region39: #{tpu_custom_call.1} parent=27 // pred_region
        %v440 = vld [vmem:[#allocation3] sm:$0x1]
        %441 = vst.msk [vmem:[%s258] sm:$0x1] %vm435, %v440
      $region40: #{tpu_custom_call.1} parent=27 // pred_fallthru
        _
      %p442 = scmp.lt.s32.totalorder %s18, 1
      %s443 = scalar_select %p442, %s18, 1
      %s444 = scalar_lea.vmem %s3, %s443
      // Predicated region
      $region41: #{tpu_custom_call.1} parent=27 // pred_check
        %p445 = pneg %p108
      $region42: #{tpu_custom_call.1} parent=27 // pred_check_branch
        %447 = sbr.rel (%p445) target = $region44
      $region43: #{tpu_custom_call.1} parent=27 // pred_region
        _
      $region44: #{tpu_custom_call.1} parent=27 // pred_fallthru
        _
    $region28: #{tpu_custom_call.1} parent=5 // pred_fallthru
      _
    %p448 = scmp.le.s32.totalorder 2, %s9
    // Predicated region
    $region45: #{tpu_custom_call.1} parent=5 // pred_check
      %p449 = pneg %p448
    $region46: #{tpu_custom_call.1} parent=5 // pred_check_branch
      %451 = sbr.rel (%p449) target = $region48
    $region47: #{tpu_custom_call.1} parent=5 // pred_region
      %s452 = ssub.s32 %s9, 2
      // Predicated region
      $region49: #{tpu_custom_call.1} parent=47 // pred_check
        %p453 = pneg %p114
      $region50: #{tpu_custom_call.1} parent=47 // pred_check_branch
        %455 = sbr.rel (%p453) target = $region52
      $region51: #{tpu_custom_call.1} parent=47 // pred_region
        %p456 = scmp.lt.s32.totalorder %s20, 1
        %s457 = scalar_select %p456, %s20, 1
        %s458 = scalar_lea.vmem %s3, %s457
      $region52: #{tpu_custom_call.1} parent=47 // pred_fallthru
        _
    $region48: #{tpu_custom_call.1} parent=5 // pred_fallthru
      _
  $region6: #{tpu_custom_call.1} parent=0 // loop_footer
    %s13 = sadd.s32 1, %s9
  $region7: #{tpu_custom_call.1} parent=0 // loop_footer_branch
    %8 = sbr.rel target = $region3
  $region8: #{tpu_custom_call.1} parent=0 // loop_exit
    _
  %459 = vsyncmov [#allocation4]
  %s460 = vpop.sfrf %459
  %p461 = scmp.eq.s32.totalorder %s460, 0
  %p462 = pneg %p461
  %464 = shalt.err (%p462)

</llo_original>
